<compile_context>
chip_gen: v5e
topology: v5e:2x2
jax: 0.10.0
libtpu: 0.0.40
codegen_flags: <defaults>
</compile_context>

<pallas_src>
import functools

import jax
import jax.numpy as jnp
from jax.experimental import pallas as pl
from jax.experimental.pallas import tpu as pltpu

_LANES = 128


def _fused_loss_kernel(mtr_p_ref, mtr_t_ref, logit_ref, tgt_ref, out_ref,
                       mse_acc, ce_acc, cnt_acc, *,
                       n_mtr_tiles, n_mlm_tiles, mtr_rows, mlm_rows,
                       inv_mtr_count, ignore_index, mtr_weight):
    i = pl.program_id(0)
    last = pl.num_programs(0) - 1

    @pl.when(i == 0)
    def _init():
        mse_acc[...] = jnp.zeros_like(mse_acc)
        ce_acc[...] = jnp.zeros_like(ce_acc)
        cnt_acc[...] = jnp.zeros_like(cnt_acc)

    # ---------------- MTR (MSE) partial: elementwise accumulate ----------
    @pl.when(i < n_mtr_tiles)
    def _mtr():
        tm = mse_acc.shape[0]
        d = mtr_p_ref[...].astype(jnp.float32) - mtr_t_ref[...].astype(jnp.float32)
        row = i * tm + jax.lax.broadcasted_iota(jnp.int32, d.shape, 0)
        # Mask rows that fall past the end of the slab (ragged last tile).
        mse_acc[...] += jnp.where(row < mtr_rows, d * d, 0.0)

    # ---------------- MLM (CE) partial: per-row nll + valid count --------
    @pl.when(i < n_mlm_tiles)
    def _mlm():
        tn = ce_acc.shape[0]
        logits = logit_ref[...].astype(jnp.float32)            # (TN, V)
        tgt = tgt_ref[...]                                       # (TN, 1) i32
        m = jnp.max(logits, axis=-1, keepdims=True)
        lse = jnp.log(jnp.sum(jnp.exp(logits - m), axis=-1, keepdims=True)) + m
        vocab = jax.lax.broadcasted_iota(jnp.int32, logits.shape, 1)
        tgt_logit = jnp.sum(jnp.where(vocab == tgt, logits, 0.0),
                            axis=-1, keepdims=True)              # (TN, 1)
        row = i * tn + jax.lax.broadcasted_iota(jnp.int32, tgt.shape, 0)
        valid = (tgt != ignore_index) & (row < mlm_rows)         # (TN, 1)
        ce_acc[...] += jnp.where(valid, lse - tgt_logit, 0.0)
        cnt_acc[...] += valid.astype(jnp.float32)

    # ---------------- Finalize: one deferred reduction ------------------
    @pl.when(i == last)
    def _fin():
        mtr_loss = jnp.sum(mse_acc[...]) * inv_mtr_count
        cnt = jnp.sum(cnt_acc[...])
        mlm_loss = jnp.sum(ce_acc[...]) / cnt   # NaN if everything ignored
        total = mtr_weight * mtr_loss + (1.0 - mtr_weight) * mlm_loss
        lane = jax.lax.broadcasted_iota(jnp.int32, out_ref.shape, 1)
        out_ref[...] = jnp.where(
            lane == 0, mtr_loss,
            jnp.where(lane == 1, mlm_loss,
                      jnp.where(lane == 2, total, 0.0)))


def join_mtr_mlm_loss(mtr_pred, mtr_target, mlm_pred, mlm_target,
                      mtr_weight=0.5, ignore_index=-1):
    assert mtr_weight <= 1.0

    # ---- MTR slab: flatten to (rows, 128), lane-dense, original dtype ----
    total = mtr_pred.size
    pad = (-total) % _LANES
    p_flat = mtr_pred.reshape(-1)
    t_flat = mtr_target.reshape(-1)
    if pad:
        # Only hit when element count is not a multiple of 128 (zero diff
        # contributes nothing to the sum of squared errors).
        p_flat = jnp.pad(p_flat, (0, pad))
        t_flat = jnp.pad(t_flat, (0, pad))
    rows = (total + pad) // _LANES
    p2 = p_flat.reshape(rows, _LANES)
    t2 = t_flat.reshape(rows, _LANES)

    # ---- MLM logits / targets (no casts, free reshapes) ------------------
    V = mlm_pred.shape[-1]
    logits = mlm_pred.reshape(-1, V)
    N = logits.shape[0]
    tgts = mlm_target.reshape(-1, 1)
    if tgts.dtype != jnp.int32:
        tgts = tgts.astype(jnp.int32)

    # ---- Tile selection ---------------------------------------------------
    # MTR row tile: big tiles reach HBM roofline; must be a multiple of 8
    # (or the full extent) to satisfy the (8,128) BlockSpec constraint.
    if rows % 8 == 0:
        TM = min(rows, 512)
    else:
        TM = rows
    n_mtr = pl.cdiv(rows, TM)

    # MLM row tile: keep the double-buffered logits tile well under the
    # v7x VMEM budget (~16 MiB for the logits stream).
    logit_bytes = logits.dtype.itemsize
    budget = 16 * 1024 * 1024
    tn_cap = max(8, (budget // (2 * V * logit_bytes)) // 8 * 8)
    if N % 8 == 0:
        TN = max(8, (min(N, 512, tn_cap) // 8) * 8)
    else:
        TN = N
    n_mlm = pl.cdiv(N, TN)

    num_steps = max(n_mtr, n_mlm)

    kernel = functools.partial(
        _fused_loss_kernel,
        n_mtr_tiles=n_mtr, n_mlm_tiles=n_mlm,
        mtr_rows=rows, mlm_rows=N,
        inv_mtr_count=1.0 / float(total),
        ignore_index=int(ignore_index),
        mtr_weight=float(mtr_weight))

    out = pl.pallas_call(
        kernel,
        out_shape=jax.ShapeDtypeStruct((1, _LANES), jnp.float32),
        grid=(num_steps,),
        in_specs=[
            pl.BlockSpec((TM, _LANES), lambda i: (jnp.minimum(i, n_mtr - 1), 0)),
            pl.BlockSpec((TM, _LANES), lambda i: (jnp.minimum(i, n_mtr - 1), 0)),
            pl.BlockSpec((TN, V), lambda i: (jnp.minimum(i, n_mlm - 1), 0)),
            pl.BlockSpec((TN, 1), lambda i: (jnp.minimum(i, n_mlm - 1), 0)),
        ],
        out_specs=pl.BlockSpec((1, _LANES), lambda i: (0, 0)),
        scratch_shapes=[
            pltpu.VMEM((TM, _LANES), jnp.float32),   # MSE elementwise partials
            pltpu.VMEM((TN, 1), jnp.float32),        # CE per-row loss partials
            pltpu.VMEM((TN, 1), jnp.float32),        # valid-row count partials
        ],
        compiler_params=pltpu.CompilerParams(
            dimension_semantics=("arbitrary",),
            vmem_limit_bytes=48 * 1024 * 1024),
    )(p2, t2, logits, tgts)

    mtr_loss = out[0, 0]
    mlm_loss = out[0, 1]
    total_loss = out[0, 2]
    return mtr_loss, mlm_loss, total_loss


def _reference(mtr_pred, mtr_target, mlm_pred, mlm_target,
               mtr_weight=0.5, ignore_index=-1):
    mtr = jnp.mean((mtr_pred.astype(jnp.float32)
                    - mtr_target.astype(jnp.float32)) ** 2)
    V = mlm_pred.shape[-1]
    logits = mlm_pred.reshape(-1, V).astype(jnp.float32)
    tgt = mlm_target.reshape(-1).astype(jnp.int32)
    logp = jax.nn.log_softmax(logits, axis=-1)
    safe_tgt = jnp.where(tgt == ignore_index, 0, tgt)
    nll = -jnp.take_along_axis(logp, safe_tgt[:, None], axis=-1)[:, 0]
    valid = (tgt != ignore_index).astype(jnp.float32)
    mlm = jnp.sum(nll * valid) / jnp.sum(valid)
    return mtr, mlm, mtr_weight * mtr + (1.0 - mtr_weight) * mlm


if __name__ == "__main__":
    key = jax.random.PRNGKey(0)
    k1, k2, k3, k4 = jax.random.split(key, 4)

    # MTR regression tensors (NCHW-like): batch=2, channels=4, spatial=16x16
    mtr_pred = jax.random.normal(k1, (2, 4, 16, 16), dtype=jnp.float32)
    mtr_target = jax.random.normal(k2, (2, 4, 16, 16), dtype=jnp.float32)

    # MLM logits: batch=2, seq=8, vocab=128; targets in [-1, 127]
    mlm_pred = jax.random.normal(k3, (2, 8, 128), dtype=jnp.float32)
    mlm_target = jax.random.randint(k4, (2, 8), minval=-1, maxval=128,
                                    dtype=jnp.int32)

    mtr_l, mlm_l, total_l = join_mtr_mlm_loss(mtr_pred, mtr_target,
                                              mlm_pred, mlm_target)
    jax.block_until_ready((mtr_l, mlm_l, total_l))

    r_mtr, r_mlm, r_total = _reference(mtr_pred, mtr_target,
                                       mlm_pred, mlm_target)
    assert jnp.allclose(mtr_l, r_mtr, rtol=1e-5, atol=1e-5)
    assert jnp.allclose(mlm_l, r_mlm, rtol=1e-5, atol=1e-5)
    assert jnp.allclose(total_l, r_total, rtol=1e-5, atol=1e-5)

    print("KERNEL_OK")
</pallas_src>

<mosaic_0001>
module attributes {stable_mosaic.version = 11 : i64} {
  func.func @_fused_loss_kernel(%arg0: i32, %arg1: memref<16x128xf32, #tpu.memory_space<vmem>>, %arg2: memref<16x128xf32, #tpu.memory_space<vmem>>, %arg3: memref<16x128xf32, #tpu.memory_space<vmem>>, %arg4: memref<16x1xi32, #tpu.memory_space<vmem>>, %arg5: memref<1x128xf32, #tpu.memory_space<vmem>>, %arg6: memref<16x128xf32, #tpu.memory_space<vmem>>, %arg7: memref<16x1xf32, #tpu.memory_space<vmem>>, %arg8: memref<16x1xf32, #tpu.memory_space<vmem>>) attributes {dimension_semantics = [#tpu.dimension_semantics<arbitrary>], iteration_bounds = array<i64: 1>, scalar_prefetch = 0 : i64, scratch_operands = 3 : i64, tpu.core_type = #tpu.core_type<tc>, window_params = [{transform_indices = @transform_0, window_bounds = array<i64: 16, 128>}, {transform_indices = @transform_1, window_bounds = array<i64: 16, 128>}, {transform_indices = @transform_2, window_bounds = array<i64: 16, 128>}, {transform_indices = @transform_3, window_bounds = array<i64: 16, 1>}, {pipeline_mode = #tpu.pipeline_mode<synchronous>, transform_indices = @transform_4, window_bounds = array<i64: 1, 128>}]} {
    %c0_i32 = arith.constant 0 : i32
    %0 = arith.cmpi eq, %arg0, %c0_i32 : i32
    %1 = arith.extui %0 : i1 to i32
    %c0_i32_0 = arith.constant 0 : i32
    %2 = arith.cmpi ne, %1, %c0_i32_0 : i32
    scf.if %2 {
      %cst = arith.constant 0.000000e+00 : f32
      %12 = vector.broadcast %cst : f32 to vector<16x128xf32>
      %c0 = arith.constant 0 : index
      %c0_6 = arith.constant 0 : index
      %13 = vector.load %arg6[%c0, %c0_6] : memref<16x128xf32, #tpu.memory_space<vmem>>, vector<16x128xf32>
      tpu.vector_store %arg6[%c0, %c0_6], %12 {strides = array<i32>} : memref<16x128xf32, #tpu.memory_space<vmem>>, vector<16x128xf32>,
      %cst_7 = arith.constant 0.000000e+00 : f32
      %14 = vector.broadcast %cst_7 : f32 to vector<16x1xf32>
      %c0_8 = arith.constant 0 : index
      %c0_9 = arith.constant 0 : index
      %15 = vector.load %arg7[%c0_8, %c0_9] : memref<16x1xf32, #tpu.memory_space<vmem>>, vector<16x1xf32>
      tpu.vector_store %arg7[%c0_8, %c0_9], %14 {strides = array<i32>} : memref<16x1xf32, #tpu.memory_space<vmem>>, vector<16x1xf32>,
      %cst_10 = arith.constant 0.000000e+00 : f32
      %16 = vector.broadcast %cst_10 : f32 to vector<16x1xf32>
      %c0_11 = arith.constant 0 : index
      %c0_12 = arith.constant 0 : index
      %17 = vector.load %arg8[%c0_11, %c0_12] : memref<16x1xf32, #tpu.memory_space<vmem>>, vector<16x1xf32>
      tpu.vector_store %arg8[%c0_11, %c0_12], %16 {strides = array<i32>} : memref<16x1xf32, #tpu.memory_space<vmem>>, vector<16x1xf32>,
    } else {
    }
    %c1_i32 = arith.constant 1 : i32
    %3 = arith.cmpi slt, %arg0, %c1_i32 : i32
    %4 = arith.extui %3 : i1 to i32
    %c0_i32_1 = arith.constant 0 : i32
    %5 = arith.cmpi ne, %4, %c0_i32_1 : i32
    scf.if %5 {
      %c0 = arith.constant 0 : index
      %c0_6 = arith.constant 0 : index
      %12 = vector.load %arg1[%c0, %c0_6] : memref<16x128xf32, #tpu.memory_space<vmem>>, vector<16x128xf32>
      %c0_7 = arith.constant 0 : index
      %c0_8 = arith.constant 0 : index
      %13 = vector.load %arg2[%c0_7, %c0_8] : memref<16x128xf32, #tpu.memory_space<vmem>>, vector<16x128xf32>
      %14 = arith.subf %12, %13 : vector<16x128xf32>
      %c16_i32 = arith.constant 16 : i32
      %15 = arith.muli %arg0, %c16_i32 : i32
      %16 = tpu.iota {dimensions = array<i32: 0>} : vector<16x128xi32>
      %17 = vector.broadcast %15 : i32 to vector<16x128xi32>
      %18 = arith.addi %17, %16 : vector<16x128xi32>
      %c0_9 = arith.constant 0 : index
      %c0_10 = arith.constant 0 : index
      %19 = vector.load %arg6[%c0_9, %c0_10] : memref<16x128xf32, #tpu.memory_space<vmem>>, vector<16x128xf32>
      %c16_i32_11 = arith.constant 16 : i32
      %20 = vector.broadcast %c16_i32_11 : i32 to vector<16x128xi32>
      %21 = arith.cmpi slt, %18, %20 : vector<16x128xi32>
      %22 = arith.mulf %14, %14 : vector<16x128xf32>
      %cst = arith.constant 0.000000e+00 : f32
      %23 = vector.broadcast %cst : f32 to vector<16x128xf32>
      %24 = arith.select %21, %22, %23 : vector<16x128xi1>, vector<16x128xf32>
      %25 = arith.addf %19, %24 : vector<16x128xf32>
      %c0_12 = arith.constant 0 : index
      %c0_13 = arith.constant 0 : index
      %26 = vector.load %arg6[%c0_12, %c0_13] : memref<16x128xf32, #tpu.memory_space<vmem>>, vector<16x128xf32>
      tpu.vector_store %arg6[%c0_12, %c0_13], %25 {strides = array<i32>} : memref<16x128xf32, #tpu.memory_space<vmem>>, vector<16x128xf32>,
    } else {
    }
    %c1_i32_2 = arith.constant 1 : i32
    %6 = arith.cmpi slt, %arg0, %c1_i32_2 : i32
    %7 = arith.extui %6 : i1 to i32
    %c0_i32_3 = arith.constant 0 : i32
    %8 = arith.cmpi ne, %7, %c0_i32_3 : i32
    scf.if %8 {
      %c0 = arith.constant 0 : index
      %c0_6 = arith.constant 0 : index
      %12 = vector.load %arg3[%c0, %c0_6] : memref<16x128xf32, #tpu.memory_space<vmem>>, vector<16x128xf32>
      %c0_7 = arith.constant 0 : index
      %c0_8 = arith.constant 0 : index
      %13 = vector.load %arg4[%c0_7, %c0_8] : memref<16x1xi32, #tpu.memory_space<vmem>>, vector<16x1xi32>
      %cst = arith.constant dense<0xFF800000> : vector<16xf32>
      %14 = vector.multi_reduction <maximumf>, %12, %cst [1] : vector<16x128xf32> to vector<16xf32>
      %15 = vector.shape_cast %14 : vector<16xf32> to vector<16x1xf32>
      %16 = vector.broadcast %15 : vector<16x1xf32> to vector<16x128xf32>
      %17 = arith.subf %12, %16 : vector<16x128xf32>
      %18 = math.exp %17 : vector<16x128xf32>
      %cst_9 = arith.constant dense<0.000000e+00> : vector<16xf32>
      %19 = vector.multi_reduction <add>, %18, %cst_9 [1] : vector<16x128xf32> to vector<16xf32>
      %20 = vector.shape_cast %19 : vector<16xf32> to vector<16x1xf32>
      %21 = math.log %20 : vector<16x1xf32>
      %22 = arith.addf %21, %15 : vector<16x1xf32>
      %23 = tpu.iota {dimensions = array<i32: 1>} : vector<16x128xi32>
      %24 = vector.broadcast %13 : vector<16x1xi32> to vector<16x128xi32>
      %25 = arith.cmpi eq, %23, %24 : vector<16x128xi32>
      %cst_10 = arith.constant 0.000000e+00 : f32
      %26 = vector.broadcast %cst_10 : f32 to vector<16x128xf32>
      %27 = arith.select %25, %12, %26 : vector<16x128xi1>, vector<16x128xf32>
      %cst_11 = arith.constant dense<0.000000e+00> : vector<16xf32>
      %28 = vector.multi_reduction <add>, %27, %cst_11 [1] : vector<16x128xf32> to vector<16xf32>
      %29 = vector.shape_cast %28 : vector<16xf32> to vector<16x1xf32>
      %c16_i32 = arith.constant 16 : i32
      %30 = arith.muli %arg0, %c16_i32 : i32
      %31 = tpu.iota {dimensions = array<i32: 0>} : vector<16x1xi32>
      %32 = vector.broadcast %30 : i32 to vector<16x1xi32>
      %33 = arith.addi %32, %31 : vector<16x1xi32>
      %c-1_i32 = arith.constant -1 : i32
      %34 = vector.broadcast %c-1_i32 : i32 to vector<16x1xi32>
      %35 = arith.cmpi ne, %13, %34 : vector<16x1xi32>
      %c16_i32_12 = arith.constant 16 : i32
      %36 = vector.broadcast %c16_i32_12 : i32 to vector<16x1xi32>
      %37 = arith.cmpi slt, %33, %36 : vector<16x1xi32>
      %38 = arith.andi %35, %37 : vector<16x1xi1>
      %c0_13 = arith.constant 0 : index
      %c0_14 = arith.constant 0 : index
      %39 = vector.load %arg7[%c0_13, %c0_14] : memref<16x1xf32, #tpu.memory_space<vmem>>, vector<16x1xf32>
      %40 = arith.subf %22, %29 : vector<16x1xf32>
      %cst_15 = arith.constant 0.000000e+00 : f32
      %41 = vector.broadcast %cst_15 : f32 to vector<16x1xf32>
      %42 = arith.select %38, %40, %41 : vector<16x1xi1>, vector<16x1xf32>
      %43 = arith.addf %39, %42 : vector<16x1xf32>
      %c0_16 = arith.constant 0 : index
      %c0_17 = arith.constant 0 : index
      %44 = vector.load %arg7[%c0_16, %c0_17] : memref<16x1xf32, #tpu.memory_space<vmem>>, vector<16x1xf32>
      tpu.vector_store %arg7[%c0_16, %c0_17], %43 {strides = array<i32>} : memref<16x1xf32, #tpu.memory_space<vmem>>, vector<16x1xf32>,
      %c0_18 = arith.constant 0 : index
      %c0_19 = arith.constant 0 : index
      %45 = vector.load %arg8[%c0_18, %c0_19] : memref<16x1xf32, #tpu.memory_space<vmem>>, vector<16x1xf32>
      %46 = arith.extui %38 : vector<16x1xi1> to vector<16x1xi32>
      %47 = arith.sitofp %46 : vector<16x1xi32> to vector<16x1xf32>
      %48 = arith.addf %45, %47 : vector<16x1xf32>
      %c0_20 = arith.constant 0 : index
      %c0_21 = arith.constant 0 : index
      %49 = vector.load %arg8[%c0_20, %c0_21] : memref<16x1xf32, #tpu.memory_space<vmem>>, vector<16x1xf32>
      tpu.vector_store %arg8[%c0_20, %c0_21], %48 {strides = array<i32>} : memref<16x1xf32, #tpu.memory_space<vmem>>, vector<16x1xf32>,
    } else {
    }
    %c0_i32_4 = arith.constant 0 : i32
    %9 = arith.cmpi eq, %arg0, %c0_i32_4 : i32
    %10 = arith.extui %9 : i1 to i32
    %c0_i32_5 = arith.constant 0 : i32
    %11 = arith.cmpi ne, %10, %c0_i32_5 : i32
    scf.if %11 {
      %c0 = arith.constant 0 : index
      %c0_6 = arith.constant 0 : index
      %12 = vector.load %arg6[%c0, %c0_6] : memref<16x128xf32, #tpu.memory_space<vmem>>, vector<16x128xf32>
      %13 = vector.shape_cast %12 : vector<16x128xf32> to vector<1x16x128xf32>
      %cst = arith.constant dense<0.000000e+00> : vector<1xf32>
      %14 = vector.multi_reduction <add>, %13, %cst [1, 2] : vector<1x16x128xf32> to vector<1xf32>
      %15 = vector.shape_cast %14 : vector<1xf32> to vector<1x1x1xf32>
      %16 = vector.extract %15[0, 0, 0] : f32 from vector<1x1x1xf32>
      %cst_7 = arith.constant 4.8828125E-4 : f32
      %17 = arith.mulf %16, %cst_7 : f32
      %c0_8 = arith.constant 0 : index
      %c0_9 = arith.constant 0 : index
      %18 = vector.load %arg8[%c0_8, %c0_9] : memref<16x1xf32, #tpu.memory_space<vmem>>, vector<16x1xf32>
      %19 = vector.shape_cast %18 : vector<16x1xf32> to vector<1x16x1xf32>
      %cst_10 = arith.constant dense<0.000000e+00> : vector<1xf32>
      %20 = vector.multi_reduction <add>, %19, %cst_10 [1, 2] : vector<1x16x1xf32> to vector<1xf32>
      %21 = vector.shape_cast %20 : vector<1xf32> to vector<1x1x1xf32>
      %22 = vector.extract %21[0, 0, 0] : f32 from vector<1x1x1xf32>
      %c0_11 = arith.constant 0 : index
      %c0_12 = arith.constant 0 : index
      %23 = vector.load %arg7[%c0_11, %c0_12] : memref<16x1xf32, #tpu.memory_space<vmem>>, vector<16x1xf32>
      %24 = vector.shape_cast %23 : vector<16x1xf32> to vector<1x16x1xf32>
      %cst_13 = arith.constant dense<0.000000e+00> : vector<1xf32>
      %25 = vector.multi_reduction <add>, %24, %cst_13 [1, 2] : vector<1x16x1xf32> to vector<1xf32>
      %26 = vector.shape_cast %25 : vector<1xf32> to vector<1x1x1xf32>
      %27 = vector.extract %26[0, 0, 0] : f32 from vector<1x1x1xf32>
      %28 = arith.divf %27, %22 : f32
      %cst_14 = arith.constant 5.000000e-01 : f32
      %29 = arith.mulf %cst_14, %17 : f32
      %cst_15 = arith.constant 5.000000e-01 : f32
      %30 = arith.mulf %cst_15, %28 : f32
      %31 = arith.addf %29, %30 : f32
      %32 = tpu.iota {dimensions = array<i32: 1>} : vector<1x128xi32>
      %c0_i32_16 = arith.constant 0 : i32
      %33 = vector.broadcast %c0_i32_16 : i32 to vector<1x128xi32>
      %34 = arith.cmpi eq, %32, %33 : vector<1x128xi32>
      %c1_i32_17 = arith.constant 1 : i32
      %35 = vector.broadcast %c1_i32_17 : i32 to vector<1x128xi32>
      %36 = arith.cmpi eq, %32, %35 : vector<1x128xi32>
      %c2_i32 = arith.constant 2 : i32
      %37 = vector.broadcast %c2_i32 : i32 to vector<1x128xi32>
      %38 = arith.cmpi eq, %32, %37 : vector<1x128xi32>
      %cst_18 = arith.constant 0.000000e+00 : f32
      %39 = vector.broadcast %31 : f32 to vector<1x128xf32>
      %40 = vector.broadcast %cst_18 : f32 to vector<1x128xf32>
      %41 = arith.select %38, %39, %40 : vector<1x128xi1>, vector<1x128xf32>
      %42 = vector.broadcast %28 : f32 to vector<1x128xf32>
      %43 = arith.select %36, %42, %41 : vector<1x128xi1>, vector<1x128xf32>
      %44 = vector.broadcast %17 : f32 to vector<1x128xf32>
      %45 = arith.select %34, %44, %43 : vector<1x128xi1>, vector<1x128xf32>
      %c0_19 = arith.constant 0 : index
      %c0_20 = arith.constant 0 : index
      %46 = vector.load %arg5[%c0_19, %c0_20] : memref<1x128xf32, #tpu.memory_space<vmem>>, vector<1x128xf32>
      tpu.vector_store %arg5[%c0_19, %c0_20], %45 {strides = array<i32>} : memref<1x128xf32, #tpu.memory_space<vmem>>, vector<1x128xf32>,
    } else {
    }
    return
  }
  func.func @transform_0(%arg0: i32) -> (i32, i32) {
    %c0_i32 = arith.constant 0 : i32
    %0 = arith.minsi %arg0, %c0_i32 : i32
    %c0_i32_0 = arith.constant 0 : i32
    %c0_i32_1 = arith.constant 0 : i32
    return %0, %c0_i32_0 : i32, i32
  }
  func.func @transform_1(%arg0: i32) -> (i32, i32) {
    %c0_i32 = arith.constant 0 : i32
    %0 = arith.minsi %arg0, %c0_i32 : i32
    %c0_i32_0 = arith.constant 0 : i32
    %c0_i32_1 = arith.constant 0 : i32
    return %0, %c0_i32_0 : i32, i32
  }
  func.func @transform_2(%arg0: i32) -> (i32, i32) {
    %c0_i32 = arith.constant 0 : i32
    %0 = arith.minsi %arg0, %c0_i32 : i32
    %c0_i32_0 = arith.constant 0 : i32
    %c0_i32_1 = arith.constant 0 : i32
    return %0, %c0_i32_0 : i32, i32
  }
  func.func @transform_3(%arg0: i32) -> (i32, i32) {
    %c0_i32 = arith.constant 0 : i32
    %0 = arith.minsi %arg0, %c0_i32 : i32
    %c0_i32_0 = arith.constant 0 : i32
    %c0_i32_1 = arith.constant 0 : i32
    return %0, %c0_i32_0 : i32, i32
  }
  func.func @transform_4(%arg0: i32) -> (i32, i32) {
    %c0_i32 = arith.constant 0 : i32
    %c0_i32_0 = arith.constant 0 : i32
    %c0_i32_1 = arith.constant 0 : i32
    return %c0_i32, %c0_i32_0 : i32, i32
  }
}

</mosaic_0001>

<llo_original>
// kernel: tpu_custom_call.1
$region0: #{tpu_custom_call.1}
  #allocation0 [shape = 'u32[]', space=smem, size = 0x4, offset = 0x4, fixed_abs, tag = 'smem constant byte address 0x4 - core index']
  #allocation1 [shape = 'u32[72,128]{1,0:T(1,128)}', space=vmem, size = 0x9000, scoped, tag = 'internal scratch']
  #allocation2 [shape = 'f32[16,128]{1,0:T(8,128)}', space=vmem, size = 0x2000, scoped, tag = 'scratch operand']
  #allocation3 [shape = 'f32[16,1]{1,0:T(8,128)}', space=vmem, size = 0x2000, scoped, tag = 'scratch operand']
  #allocation4 [shape = 'f32[16,1]{1,0:T(8,128)}', space=vmem, size = 0x2000, scoped, tag = 'scratch operand']
  %s0 = inlined_call_operand.vmem [shape: f32[16,128], index: 0, kind: input, shape index: {}]
  %s1 = inlined_call_operand.hbm [shape: f32[16,128], index: 1, kind: input, shape index: {}]
  %s2 = inlined_call_operand.hbm [shape: f32[16,128], index: 2, kind: input, shape index: {}]
  %s3 = inlined_call_operand.vmem [shape: s32[16,1], index: 3, kind: input, shape index: {}]
  %s4 = inlined_call_operand.hbm [shape: f32[1,128], index: 4, kind: output, shape index: {}]
  %s5 = sld [smem:[#allocation0]]
  $region46: #{tpu_custom_call.1} parent=0
    _
  %s7 = ssub.s32 1, %s5
  %s8 = scalar_select 0, %s7, %s5
  $region1: #{tpu_custom_call.1} parent=0
    #allocation5 [shape = 'u8[8192]{0}', space=vmem, size = 0x2000, scoped, tag = 'input window, operand 1, single buffered']
    #allocation6 [shape = 's32[1]{0}', space=sflag, size = 0x4, scoped, tag = 'scoped memory for tpu_custom_call.1']
    #allocation7 [shape = 's32[1]{0}', space=sflag, size = 0x4, scoped, tag = 'scoped memory for tpu_custom_call.1']
    #allocation8 [shape = 'u8[8192]{0}', space=vmem, size = 0x2000, scoped, tag = 'input window, operand 2, single buffered']
    #allocation9 [shape = 's32[1]{0}', space=sflag, size = 0x4, scoped, tag = 'scoped memory for tpu_custom_call.1']
    #allocation10 [shape = 'u8[512]{0}', space=vmem, size = 0x400, scoped, tag = 'output window, operand 0, single buffered']
    %9 = vsyncpa [#allocation6], 0
    %10 = vsyncpa [#allocation9], 0
    %11 = vsyncpa [#allocation7], 0
    // Predicated region
    $region2: #{tpu_custom_call.1} parent=1 // pred_check
      _
    $region3: #{tpu_custom_call.1} parent=1 // pred_check_branch
      %13 = sbr.rel (0) target = $region5
    $region4: #{tpu_custom_call.1} parent=1 // pred_region
      _
    $region5: #{tpu_custom_call.1} parent=1 // pred_fallthru
      _
    // Predicated region
    $region6: #{tpu_custom_call.1} parent=1 // pred_check
      _
    $region7: #{tpu_custom_call.1} parent=1 // pred_check_branch
      %15 = sbr.rel (0) target = $region9
    $region8: #{tpu_custom_call.1} parent=1 // pred_region
      %17 = vsyncadd [#allocation6], 0
      %s18 = sshll.u32 %s1, 4
      %s19 = int_to_ptr.hbm [resolvable:$true] %s18
      %s20 = sshll.u32 [#allocation5], 4
      %s21 = int_to_ptr.vmem [resolvable:$true] %s20
      %26 = dma.hbm_to_vmem [thread:$0]  %s19, 256, %s21, [#allocation6], 128, 128, 8
    $region9: #{tpu_custom_call.1} parent=1 // pred_fallthru
      _
    // Predicated region
    $region10: #{tpu_custom_call.1} parent=1 // pred_check
      _
    $region11: #{tpu_custom_call.1} parent=1 // pred_check_branch
      %28 = sbr.rel (0) target = $region13
    $region12: #{tpu_custom_call.1} parent=1 // pred_region
      %30 = vsyncadd [#allocation9], 0
      %s31 = sshll.u32 %s2, 4
      %s32 = int_to_ptr.hbm [resolvable:$true] %s31
      %s33 = sshll.u32 [#allocation8], 4
      %s34 = int_to_ptr.vmem [resolvable:$true] %s33
      %39 = dma.hbm_to_vmem [thread:$0]  %s32, 256, %s34, [#allocation9], 128, 128, 8
    $region13: #{tpu_custom_call.1} parent=1 // pred_fallthru
      _
    // Predicated region
    $region14: #{tpu_custom_call.1} parent=1 // pred_check
      _
    $region15: #{tpu_custom_call.1} parent=1 // pred_check_branch
      %41 = sbr.rel (0) target = $region17
    $region16: #{tpu_custom_call.1} parent=1 // pred_region
      _
    $region17: #{tpu_custom_call.1} parent=1 // pred_fallthru
      _
    // Predicated region
    $region18: #{tpu_custom_call.1} parent=1 // pred_check
      _
    $region19: #{tpu_custom_call.1} parent=1 // pred_check_branch
      %43 = sbr.rel (0) target = $region21
    $region20: #{tpu_custom_call.1} parent=1 // pred_region
      %45 = dma.done [#allocation6], 256
    $region21: #{tpu_custom_call.1} parent=1 // pred_fallthru
      _
    // Predicated region
    $region22: #{tpu_custom_call.1} parent=1 // pred_check
      _
    $region23: #{tpu_custom_call.1} parent=1 // pred_check_branch
      %47 = sbr.rel (0) target = $region25
    $region24: #{tpu_custom_call.1} parent=1 // pred_region
      %49 = dma.done [#allocation9], 256
    $region25: #{tpu_custom_call.1} parent=1 // pred_fallthru
      _
    %p50 = scmp.eq.s32.totalorder 0, 0
    // Predicated region
    $region26: #{tpu_custom_call.1} parent=1 // pred_check
      %p51 = pneg %p50
    $region27: #{tpu_custom_call.1} parent=1 // pred_check_branch
      %53 = sbr.rel (%p51) target = $region29
    $region28: #{tpu_custom_call.1} parent=1 // pred_region
      %54 = vst [vmem:[#allocation2] sm:$0xff] 0.0
      %55 = vst [vmem:[#allocation2 + $0x8] sm:$0xff] 0.0
      %vm56 = vcmask 7168
      %57 = vst.msk [vmem:[#allocation3] sm:$0xff] %vm56, 0.0
      %58 = vst.msk [vmem:[#allocation3 + $0x8] sm:$0xff] %vm56, 0.0
      %59 = vst.msk [vmem:[#allocation4] sm:$0xff] %vm56, 0.0
      %60 = vst.msk [vmem:[#allocation4 + $0x8] sm:$0xff] %vm56, 0.0
    $region29: #{tpu_custom_call.1} parent=1 // pred_fallthru
      _
    %p61 = scmp.lt.s32.totalorder 0, 1
    // Predicated region
    $region30: #{tpu_custom_call.1} parent=1 // pred_check
      %p62 = pneg %p61
    $region31: #{tpu_custom_call.1} parent=1 // pred_check_branch
      %64 = sbr.rel (%p62) target = $region33
    $region32: #{tpu_custom_call.1} parent=1 // pred_region
      %v65 = vld [vmem:[%s0] sm:$0xff]
      %v66 = vld [vmem:[%s0 + $0x8] sm:$0xff]
      %v67 = vld [vmem:[#allocation5] sm:$0xff]
      %v68 = vld [vmem:[#allocation5 + $0x8] sm:$0xff]
      %v69 = vsub.f32 %v65, %v67
      %v70 = vsub.f32 %v66, %v68
      %s71 = smul.u32 0, 16
      %v72 = vlaneseq
      %v73 = vshrl.u32 %v72, 7
      %v74 = vadd.s32 %v73, 8
      %v75 = vstv %s71
      %v76 = vadd.s32 %v75, %v73
      %v77 = vadd.s32 %v75, %v74
      %v78 = vld [vmem:[#allocation2] sm:$0xff]
      %v79 = vld [vmem:[#allocation2 + $0x8] sm:$0xff]
      %vm80 = vcmp.lt.s32.totalorder %v76, 16
      %vm81 = vcmp.lt.s32.totalorder %v77, 16
      %v82 = vmul.f32 %v69, %v69
      %v83 = vmul.f32 %v70, %v70
      %v84 = vsel %vm80, %v82, 0.0
      %v85 = vsel %vm81, %v83, 0.0
      %v86 = vadd.f32 %v78, %v84
      %v87 = vadd.f32 %v79, %v85
      %88 = vst [vmem:[#allocation2] sm:$0xff] %v86
      %89 = vst [vmem:[#allocation2 + $0x8] sm:$0xff] %v87
      %v90 = vld [vmem:[#allocation8] sm:$0xff]
      %v91 = vld [vmem:[#allocation8 + $0x8] sm:$0xff]
      %v92 = vld [vmem:[%s3] sm:$0xff]
      %v93 = vld [vmem:[%s3 + $0x8] sm:$0xff]
      %94 = vmax.xlane.f32.xlu0 %v90
      %v95 = vpop.xlane.xlu0 %94
      %96 = vmax.xlane.f32.xlu0 %v91
      %v97 = vpop.xlane.xlu0 %96
      %v98 = vsub.f32 %v90, %v95
      %v99 = vsub.f32 %v91, %v97
      %v100 = vmul.f32 %v98, 1.442695
      %v101 = vpow.pop %v100
      %v102 = vmul.f32 %v99, 1.442695
      %v103 = vpow.pop %v102
      %104 = vadd.xlane.f32.xlu0 %v101
      %v105 = vpop.xlane.xlu0 %104
      %106 = vadd.xlane.f32.xlu0 %v103
      %v107 = vpop.xlane.xlu0 %106
      %v108 = vlog2.pop %v105
      %v109 = vmul.f32 %v108, 0.6931472
      %v110 = vlog2.pop %v107
      %v111 = vmul.f32 %v110, 0.6931472
      %v112 = vadd.f32 %v109, %v95
      %v113 = vadd.f32 %v111, %v97
      %v114 = vlaneseq
      %v115 = vand.u32 %v114, 127
      %116 = vset.pattern.permute.xlu0 0
      %117 = vperm.xlu0 %116, %v92
      %v118 = vpop.permute.xlu0 %117
      %119 = vset.pattern.permute.xlu0 0
      %120 = vperm.xlu0 %119, %v93
      %v121 = vpop.permute.xlu0 %120
      %vm122 = vcmp.eq.s32.totalorder %v115, %v118
      %vm123 = vcmp.eq.s32.totalorder %v115, %v121
      %v124 = vsel %vm122, %v90, 0.0
      %v125 = vsel %vm123, %v91, 0.0
      %126 = vadd.xlane.f32.xlu0 %v124
      %v127 = vpop.xlane.xlu0 %126
      %128 = vadd.xlane.f32.xlu0 %v125
      %v129 = vpop.xlane.xlu0 %128
      %vm130 = vcmp.ne.s32.totalorder %v92, 4294967295
      %vm131 = vcmp.ne.s32.totalorder %v93, 4294967295
      %vm132 = vmand %vm130, %vm80
      %vm133 = vmand %vm131, %vm81
      %v134 = vld [vmem:[#allocation3] sm:$0xff]
      %v135 = vld [vmem:[#allocation3 + $0x8] sm:$0xff]
      %v136 = vsub.f32 %v112, %v127
      %v137 = vsub.f32 %v113, %v129
      %v138 = vsel %vm132, %v136, 0.0
      %v139 = vsel %vm133, %v137, 0.0
      %v140 = vadd.f32 %v134, %v138
      %v141 = vadd.f32 %v135, %v139
      %vm142 = vcmask 7168
      %143 = vst.msk [vmem:[#allocation3] sm:$0xff] %vm142, %v140
      %144 = vst.msk [vmem:[#allocation3 + $0x8] sm:$0xff] %vm142, %v141
      %v145 = vld [vmem:[#allocation4] sm:$0xff]
      %v146 = vld [vmem:[#allocation4 + $0x8] sm:$0xff]
      %v147 = vsel %vm132, 1, 0
      %v148 = vsel %vm133, 1, 0
      %v149 = vcvt.s32.f32 %v147
      %v150 = vcvt.s32.f32 %v148
      %v151 = vadd.f32 %v145, %v149
      %v152 = vadd.f32 %v146, %v150
      %153 = vst.msk [vmem:[#allocation4] sm:$0xff] %vm142, %v151
      %154 = vst.msk [vmem:[#allocation4 + $0x8] sm:$0xff] %vm142, %v152
    $region33: #{tpu_custom_call.1} parent=1 // pred_fallthru
      _
    // Predicated region
    $region34: #{tpu_custom_call.1} parent=1 // pred_check
      %p155 = pneg %p50
    $region35: #{tpu_custom_call.1} parent=1 // pred_check_branch
      %157 = sbr.rel (%p155) target = $region37
    $region36: #{tpu_custom_call.1} parent=1 // pred_region
      %v158 = vld [vmem:[#allocation2] sm:$0xff]
      %v159 = vld [vmem:[#allocation2 + $0x8] sm:$0xff]
      %v160 = vadd.f32 %v158, %v159
      %161 = vadd.xlane.f32.xlu0 %v160
      %v162 = vpop.xlane.xlu0 %161
      %v163 = vrot.slane %v162, 4
      %v164 = vadd.f32 %v162, %v163
      %v165 = vrot.slane %v164, 2
      %v166 = vadd.f32 %v164, %v165
      %v167 = vrot.slane %v166, 1
      %v168 = vadd.f32 %v166, %v167
      %s169 = vtos %v168
      %s170 = smul.f32 %s169, 0.00048828125
      %v171 = vld [vmem:[#allocation4] sm:$0xff]
      %v172 = vld [vmem:[#allocation4 + $0x8] sm:$0xff]
      %vm173 = vcmask 7168
      %v174 = vsel %vm173, %v171, 0.0
      %v175 = vsel %vm173, %v172, 0.0
      %v176 = vadd.f32 %v174, %v175
      %177 = vadd.xlane.f32.xlu0 %v176
      %v178 = vpop.xlane.xlu0 %177
      %v179 = vrot.slane %v178, 4
      %v180 = vadd.f32 %v178, %v179
      %v181 = vrot.slane %v180, 2
      %v182 = vadd.f32 %v180, %v181
      %v183 = vrot.slane %v182, 1
      %v184 = vadd.f32 %v182, %v183
      %s185 = vtos %v184
      %v186 = vld [vmem:[#allocation3] sm:$0xff]
      %v187 = vld [vmem:[#allocation3 + $0x8] sm:$0xff]
      %v188 = vsel %vm173, %v186, 0.0
      %v189 = vsel %vm173, %v187, 0.0
      %v190 = vadd.f32 %v188, %v189
      %191 = vadd.xlane.f32.xlu0 %v190
      %v192 = vpop.xlane.xlu0 %191
      %v193 = vrot.slane %v192, 4
      %v194 = vadd.f32 %v192, %v193
      %v195 = vrot.slane %v194, 2
      %v196 = vadd.f32 %v194, %v195
      %v197 = vrot.slane %v196, 1
      %v198 = vadd.f32 %v196, %v197
      %s199 = vtos %v198
      %v200 = vstv %s185
      %v201 = vrcp.pop %v200
      %v202 = vmul.f32 %v200, %v201
      %v203 = vsub.f32 1.0, %v202
      %v204 = vmul.f32 %v201, %v203
      %v205 = vadd.f32 %v201, %v204
      %vm206 = vweird.f32 %v200
      %vm207 = vweird.f32 %v201
      %vm208 = vmor %vm206, %vm207
      %v209 = vsel %vm208, %v201, %v205
      %v210 = vand.u32 2147483647, %v200
      %vm211 = vcmp.eq.f32.partialorder %v210, 8.507059e+37
      %v212 = vand.u32 %v200, 2147483648
      %v213 = vor.u32 1.1754944e-38, %v212
      %v214 = vsel %vm211, %v213, %v209
      %s215 = vtos %v214
      %s216 = smul.f32 %s199, %s215
      %s217 = smul.f32 %s170, 0.5
      %s218 = smul.f32 %s216, 0.5
      %s219 = sadd.f32 %s217, %s218
      %v220 = vlaneseq
      %v221 = vand.u32 %v220, 127
      %vm222 = vcmp.eq.s32.totalorder %v221, 0
      %vm223 = vcmp.eq.s32.totalorder %v221, 1
      %vm224 = vcmp.eq.s32.totalorder %v221, 2
      %v225 = vstv %s219
      %v226 = vsel %vm224, %v225, 0.0
      %v227 = vstv %s216
      %v228 = vsel %vm223, %v227, %v226
      %v229 = vstv %s170
      %v230 = vsel %vm222, %v229, %v228
      %231 = vst [vmem:[#allocation10] sm:$0x1] %v230
    $region37: #{tpu_custom_call.1} parent=1 // pred_fallthru
      _
    // Predicated region
    $region38: #{tpu_custom_call.1} parent=1 // pred_check
      _
    $region39: #{tpu_custom_call.1} parent=1 // pred_check_branch
      %233 = sbr.rel (0) target = $region41
    $region40: #{tpu_custom_call.1} parent=1 // pred_region
      %235 = vsyncadd [#allocation7], 0
      %s237 = sshll.u32 [#allocation10], 4
      %s238 = int_to_ptr.vmem [resolvable:$true] %s237
      %s239 = sshll.u32 %s4, 4
      %s240 = int_to_ptr.hbm [resolvable:$true] %s239
      %242 = dma.vmem_to_hbm [thread:$0]  %s238, 16, %s240, [#allocation7]
    $region41: #{tpu_custom_call.1} parent=1 // pred_fallthru
      _
    // Predicated region
    $region42: #{tpu_custom_call.1} parent=1 // pred_check
      _
    $region43: #{tpu_custom_call.1} parent=1 // pred_check_branch
      %244 = sbr.rel (0) target = $region45
    $region44: #{tpu_custom_call.1} parent=1 // pred_region
      %246 = dma.done [#allocation7], 16
    $region45: #{tpu_custom_call.1} parent=1 // pred_fallthru
      _
    %247 = vsyncpa [#allocation6], 1
    %248 = vsyncpa [#allocation9], 1
    %249 = vsyncpa [#allocation7], 1

</llo_original>
